<compile_context>
chip_gen: v7x
topology: tpu7x:2x2x1
jax: 0.10.0
libtpu: 0.0.40
codegen_flags: <defaults>
</compile_context>

<pallas_src>
import math

import jax
import jax.numpy as jnp
from jax.experimental import pallas as pl
from jax.experimental.pallas import tpu as pltpu


def _round_up(x: int, m: int) -> int:
    return ((x + m - 1) // m) * m


# ----------------------------------------------------------------------------
# Glue: theta (scale * rotation), bilinear weight matrix + K-band metadata.
# ----------------------------------------------------------------------------
def make_theta(scale: float, rot: float) -> jnp.ndarray:
    """theta = (S @ R)[0:2, :], same for every batch element (floats only)."""
    s = float(scale)
    c, sn = math.cos(float(rot)), math.sin(float(rot))
    S = jnp.array([[s, 0.0, 0.0], [0.0, s, 0.0], [0.0, 0.0, 1.0]], jnp.float32)
    R = jnp.array([[c, -sn, 0.0], [sn, c, 0.0], [0.0, 0.0, 1.0]], jnp.float32)
    return (S @ R)[0:2, :]  # (2, 3)


def make_resample_matrix(theta, hin, win, hout, wout):
    """Dense (K=Hin*Win, P=Hout*Wout) bilinear grid_sample weight matrix.

    Semantics match F.affine_grid + F.grid_sample with mode='bilinear',
    padding_mode='zeros', align_corners=False.  Also returns, per output
    pixel, the min/max nonzero input-row index (for K-band tiling).
    """
    # affine_grid base coordinates (align_corners=False: pixel centers).
    xs = -1.0 + (2.0 * jnp.arange(wout, dtype=jnp.float32) + 1.0) / wout
    ys = -1.0 + (2.0 * jnp.arange(hout, dtype=jnp.float32) + 1.0) / hout
    gy, gx = jnp.meshgrid(ys, xs, indexing="ij")                    # (Hout, Wout)
    sx = theta[0, 0] * gx + theta[0, 1] * gy + theta[0, 2]
    sy = theta[1, 0] * gx + theta[1, 1] * gy + theta[1, 2]
    gx = sx.reshape(-1)
    gy = sy.reshape(-1)                                             # (P,)

    # grid_sample unnormalization (align_corners=False).
    ix = ((gx + 1.0) * win - 1.0) * 0.5
    iy = ((gy + 1.0) * hin - 1.0) * 0.5

    x0 = jnp.floor(ix)
    y0 = jnp.floor(iy)
    wx1 = ix - x0
    wy1 = iy - y0
    wx0 = 1.0 - wx1
    wy0 = 1.0 - wy1

    P = hout * wout
    K = hin * win
    pidx = jnp.arange(P, dtype=jnp.int32)

    Wmat = jnp.zeros((K, P), jnp.float32)
    row_min = jnp.full((P,), K - 1, jnp.int32)   # neutral for min
    row_max = jnp.zeros((P,), jnp.int32)         # neutral for max

    for xc, yc, wgt in (
        (x0,       y0,       wx0 * wy0),
        (x0 + 1.0, y0,       wx1 * wy0),
        (x0,       y0 + 1.0, wx0 * wy1),
        (x0 + 1.0, y0 + 1.0, wx1 * wy1),
    ):
        xi = xc.astype(jnp.int32)
        yi = yc.astype(jnp.int32)
        valid = (xi >= 0) & (xi < win) & (yi >= 0) & (yi < hin)
        flat = jnp.clip(yi, 0, hin - 1) * win + jnp.clip(xi, 0, win - 1)
        w = wgt * valid.astype(jnp.float32)
        # Scatter-add: no dense one_hot(P, K) intermediates.
        Wmat = Wmat.at[flat, pidx].add(w)
        row_min = jnp.where(valid, jnp.minimum(row_min, flat), row_min)
        row_max = jnp.where(valid, jnp.maximum(row_max, flat), row_max)

    return Wmat, row_min, row_max


# ----------------------------------------------------------------------------
# Pallas kernel: tiled out (tm, tn) += x (tm, tk) @ W (tk, tn) over a K band.
# ----------------------------------------------------------------------------
def _resample_kernel(kstart_ref, x_ref, w_ref, o_ref, acc_ref):
    # kstart_ref (scalar prefetch) is consumed only by the index_maps.
    del kstart_ref
    k = pl.program_id(2)

    @pl.when(k == 0)
    def _():
        acc_ref[...] = jnp.zeros_like(acc_ref)

    acc_ref[...] += jnp.dot(
        x_ref[...], w_ref[...], preferred_element_type=jnp.float32
    )

    @pl.when(k == pl.num_programs(2) - 1)
    def _():
        o_ref[...] = acc_ref[...].astype(o_ref.dtype)


def grid_sample_matmul(x_flat, w_mat, row_min, row_max):
    """x_flat: (M, K) f32, w_mat: (K, P) f32 -> (M, P) f32 via banded matmul."""
    M, K = x_flat.shape
    _, P = w_mat.shape

    # ---- Tile sizes (fit all generations; <~10 MiB VMEM double-buffered). ----
    tn = 256                               # lane-dense output, fills v6e/v7x MXU
    tk = min(2048, _round_up(K, 128))      # K tile (lane dim of x, sublane of W)
    M_pad = _round_up(M, 8)
    if M_pad > 256:
        M_pad = _round_up(M_pad, 256)
        tm = 256
    else:
        tm = M_pad
    K_pad = _round_up(K, tk)
    P_pad = _round_up(P, tn)

    # ---- Pad operands to lane/sublane-aligned shapes (sliced off at the end).
    x_p = jnp.pad(x_flat, ((0, M_pad - M), (0, K_pad - K)))
    w_p = jnp.pad(w_mat, ((0, K_pad - K), (0, P_pad - P)))

    num_p_tiles = P_pad // tn
    kb_total = K_pad // tk

    # ---- Per-P-tile K band: only blocks holding nonzero W rows are visited.
    rmin = jnp.pad(row_min, (0, P_pad - P), constant_values=K - 1)
    rmax = jnp.pad(row_max, (0, P_pad - P), constant_values=0)
    lo_blk = rmin.reshape(num_p_tiles, tn).min(axis=1) // tk
    hi_blk = rmax.reshape(num_p_tiles, tn).max(axis=1) // tk
    nkb = int(jnp.max(jnp.maximum(hi_blk - lo_blk + 1, 1)))   # static grid extent
    kstart = jnp.clip(lo_blk, 0, kb_total - nkb).astype(jnp.int32)

    grid = (M_pad // tm, num_p_tiles, nkb)

    flops = 2 * M_pad * (nkb * tk) * P_pad
    bytes_accessed = 4 * (M_pad * K_pad + (nkb * tk) * P_pad + M_pad * P_pad)

    out = pl.pallas_call(
        _resample_kernel,
        out_shape=jax.ShapeDtypeStruct((M_pad, P_pad), jnp.float32),
        grid_spec=pltpu.PrefetchScalarGridSpec(
            num_scalar_prefetch=1,
            grid=grid,
            in_specs=[
                # x K-slice follows the per-tile band start.
                pl.BlockSpec((tm, tk), lambda i, j, k, ks: (i, ks[j] + k)),
                # W K-slice follows the same band start.
                pl.BlockSpec((tk, tn), lambda i, j, k, ks: (ks[j] + k, j)),
            ],
            out_specs=pl.BlockSpec((tm, tn), lambda i, j, k, ks: (i, j)),
            scratch_shapes=[pltpu.VMEM((tm, tn), jnp.float32)],
        ),
        compiler_params=pltpu.CompilerParams(
            dimension_semantics=("parallel", "parallel", "arbitrary"),
            vmem_limit_bytes=48 * 1024 * 1024,
        ),
        cost_estimate=pl.CostEstimate(
            flops=flops, transcendentals=0, bytes_accessed=bytes_accessed
        ),
    )(kstart, x_p, w_p)

    return out[:M, :P]


# ----------------------------------------------------------------------------
# AUGFLY forward.
# ----------------------------------------------------------------------------
def augfly_forward(x, outshape, scale=1.0, rot=0.0):
    """x: (N, C, Hin, Win) float32 -> (N, C, outshape, outshape) float32."""
    n, c, hin, win = x.shape
    theta = make_theta(scale, rot)                                       # (2, 3)
    w_mat, row_min, row_max = make_resample_matrix(theta, hin, win, outshape, outshape)
    x_flat = x.reshape(n * c, hin * win).astype(jnp.float32)
    out_flat = grid_sample_matmul(x_flat, w_mat, row_min, row_max)
    return out_flat.reshape(n, c, outshape, outshape)
    # TODO(synk): tuple-valued scale/rot (random uniform draw per call) from the
    # PyTorch module is not implemented; fixed floats (the defaults) are used.


if __name__ == "__main__":
    key = jax.random.PRNGKey(0)
    N, C, H, W = 2, 4, 16, 16
    inshape, outshape = 16, 16

    x = jax.random.normal(key, (N, C, H, W), dtype=jnp.float32)

    # ---- Module defaults: scale=1, rot=0 -> identity transform. ----
    out = augfly_forward(x, outshape, scale=1.0, rot=0.0)
    out = jax.block_until_ready(out)
    assert out.shape == (N, C, outshape, outshape)
    assert bool(jnp.all(jnp.isfinite(out)))
    # Identity transform must reproduce the input exactly (grid points land on
    # pixel centers with align_corners=False).
    assert bool(jnp.allclose(out, x, atol=1e-5))

    # ---- Non-trivial transform: Pallas kernel vs plain-JAX dense reference. ----
    scale2, rot2 = 0.8, 0.3
    theta2 = make_theta(scale2, rot2)
    w2, rmin2, rmax2 = make_resample_matrix(theta2, H, W, outshape, outshape)
    x_flat = x.reshape(N * C, H * W)
    out2 = grid_sample_matmul(x_flat, w2, rmin2, rmax2)
    ref2 = x_flat @ w2
    out2 = jax.block_until_ready(out2)
    assert bool(jnp.allclose(out2, ref2, atol=1e-4, rtol=1e-4))

    print("KERNEL_OK")
</pallas_src>

<mosaic_0001>
module attributes {stable_mosaic.version = 11 : i64} {
  func.func @_resample_kernel(%arg0: i32, %arg1: i32, %arg2: i32, %arg3: memref<1xi32, #tpu.memory_space<smem>>, %arg4: memref<8x256xf32, #tpu.memory_space<vmem>>, %arg5: memref<256x256xf32, #tpu.memory_space<vmem>>, %arg6: memref<8x256xf32, #tpu.memory_space<vmem>>, %arg7: memref<8x256xf32, #tpu.memory_space<vmem>>) attributes {dimension_semantics = [#tpu.dimension_semantics<parallel>, #tpu.dimension_semantics<parallel>, #tpu.dimension_semantics<arbitrary>], iteration_bounds = array<i64: 1, 1, 1>, scalar_prefetch = 1 : i64, scratch_operands = 1 : i64, tpu.core_type = #tpu.core_type<tc>, window_params = [{transform_indices = @transform_0, window_bounds = array<i64: 8, 256>}, {transform_indices = @transform_1, window_bounds = array<i64: 256, 256>}, {transform_indices = @transform_2, window_bounds = array<i64: 8, 256>}]} {
    %c0_i32 = arith.constant 0 : i32
    %0 = arith.cmpi eq, %arg2, %c0_i32 : i32
    %1 = arith.extui %0 : i1 to i32
    %c0_i32_0 = arith.constant 0 : i32
    %2 = arith.cmpi ne, %1, %c0_i32_0 : i32
    scf.if %2 {
      %cst_10 = arith.constant 0.000000e+00 : f32
      %12 = vector.broadcast %cst_10 : f32 to vector<8x256xf32>
      %c0_11 = arith.constant 0 : index
      %c0_12 = arith.constant 0 : index
      %13 = vector.load %arg7[%c0_11, %c0_12] : memref<8x256xf32, #tpu.memory_space<vmem>>, vector<8x256xf32>
      tpu.vector_store %arg7[%c0_11, %c0_12], %12 {strides = array<i32>} : memref<8x256xf32, #tpu.memory_space<vmem>>, vector<8x256xf32>,
    } else {
    }
    %c0 = arith.constant 0 : index
    %c0_1 = arith.constant 0 : index
    %3 = vector.load %arg7[%c0, %c0_1] : memref<8x256xf32, #tpu.memory_space<vmem>>, vector<8x256xf32>
    %c0_2 = arith.constant 0 : index
    %c0_3 = arith.constant 0 : index
    %4 = vector.load %arg4[%c0_2, %c0_3] : memref<8x256xf32, #tpu.memory_space<vmem>>, vector<8x256xf32>
    %c0_4 = arith.constant 0 : index
    %c0_5 = arith.constant 0 : index
    %5 = vector.load %arg5[%c0_4, %c0_5] : memref<256x256xf32, #tpu.memory_space<vmem>>, vector<256x256xf32>
    %cst = arith.constant dense<0.000000e+00> : vector<8x256xf32>
    %6 = tpu.matmul %4, %5, %cst {dimension_numbers = #tpu.dot_dimension_numbers<[1], [0], [0], [1], [0, 0, 1, 1], [], []>} : vector<8x256xf32>, vector<256x256xf32>, vector<8x256xf32> -> vector<8x256xf32>
    %7 = arith.addf %3, %6 : vector<8x256xf32>
    %c0_6 = arith.constant 0 : index
    %c0_7 = arith.constant 0 : index
    %8 = vector.load %arg7[%c0_6, %c0_7] : memref<8x256xf32, #tpu.memory_space<vmem>>, vector<8x256xf32>
    tpu.vector_store %arg7[%c0_6, %c0_7], %7 {strides = array<i32>} : memref<8x256xf32, #tpu.memory_space<vmem>>, vector<8x256xf32>,
    %c0_i32_8 = arith.constant 0 : i32
    %9 = arith.cmpi eq, %arg2, %c0_i32_8 : i32
    %10 = arith.extui %9 : i1 to i32
    %c0_i32_9 = arith.constant 0 : i32
    %11 = arith.cmpi ne, %10, %c0_i32_9 : i32
    scf.if %11 {
      %c0_10 = arith.constant 0 : index
      %c0_11 = arith.constant 0 : index
      %12 = vector.load %arg7[%c0_10, %c0_11] : memref<8x256xf32, #tpu.memory_space<vmem>>, vector<8x256xf32>
      %c0_12 = arith.constant 0 : index
      %c0_13 = arith.constant 0 : index
      %13 = vector.load %arg6[%c0_12, %c0_13] : memref<8x256xf32, #tpu.memory_space<vmem>>, vector<8x256xf32>
      tpu.vector_store %arg6[%c0_12, %c0_13], %12 {strides = array<i32>} : memref<8x256xf32, #tpu.memory_space<vmem>>, vector<8x256xf32>,
    } else {
    }
    return
  }
  func.func @transform_0(%arg0: i32, %arg1: i32, %arg2: i32, %arg3: memref<1xi32, #tpu.memory_space<smem>>) -> (i32, i32) {
    %0 = arith.index_cast %arg1 : i32 to index
    %1 = memref.load %arg3[%0] : memref<1xi32, #tpu.memory_space<smem>>
    %2 = arith.addi %1, %arg2 : i32
    %c0_i32 = arith.constant 0 : i32
    return %arg0, %2 : i32, i32
  }
  func.func @transform_1(%arg0: i32, %arg1: i32, %arg2: i32, %arg3: memref<1xi32, #tpu.memory_space<smem>>) -> (i32, i32) {
    %0 = arith.index_cast %arg1 : i32 to index
    %1 = memref.load %arg3[%0] : memref<1xi32, #tpu.memory_space<smem>>
    %2 = arith.addi %1, %arg2 : i32
    %c0_i32 = arith.constant 0 : i32
    return %2, %arg1 : i32, i32
  }
  func.func @transform_2(%arg0: i32, %arg1: i32, %arg2: i32, %arg3: memref<1xi32, #tpu.memory_space<smem>>) -> (i32, i32) {
    %c0_i32 = arith.constant 0 : i32
    return %arg0, %arg1 : i32, i32
  }
}

</mosaic_0001>

<llo_original>
// kernel: tpu_custom_call.1
$region0: #{tpu_custom_call.1}
  #allocation0 [shape = 'u32[]', space=smem, size = 0x4, offset = 0x4, fixed_abs, tag = 'smem constant byte address 0x4 - core index']
  #allocation1 [shape = 'u32[144,128]{1,0:T(1,128)}', space=vmem, size = 0x12000, scoped, tag = 'internal scratch']
  #allocation2 [shape = 'f32[8,256]{1,0:T(8,128)}', space=vmem, size = 0x2000, scoped, tag = 'scratch operand']
  #allocation3 [shape = 's32[1]{0}', space=sflag, size = 0x4, scoped, tag = 'scoped memory for tpu_custom_call.1']
  #allocation4 [shape = 's32[1]{0:T(128)S(6)}', space=smem, size = 0x200, scoped, tag = 'prefetched SMEM operand 0']
  %s0 = inlined_call_operand.<no memory space> [shape: s32[1], index: 0, kind: input, shape index: {}]
  %s1 = inlined_call_operand.hbm [shape: f32[8,256], index: 1, kind: input, shape index: {}]
  %s2 = inlined_call_operand.hbm [shape: f32[256,256], index: 2, kind: input, shape index: {}]
  %s3 = inlined_call_operand.hbm [shape: f32[8,256], index: 3, kind: output, shape index: {}]
  %s4 = sld [smem:[#allocation0]]
  $region34: #{tpu_custom_call.1} parent=0
    _
  %s6 = ssub.s32 1, %s4
  %s7 = scalar_select 0, %s6, %s4
  %8 = sst [smem:[#allocation4]] %s0
  $region1: #{tpu_custom_call.1} parent=0
    #allocation5 [shape = 'u8[8192]{0}', space=vmem, size = 0x2000, scoped, tag = 'input window, operand 1, single buffered']
    #allocation6 [shape = 's32[1]{0}', space=sflag, size = 0x4, scoped, tag = 'scoped memory for tpu_custom_call.1']
    #allocation7 [shape = 's32[1]{0}', space=sflag, size = 0x4, scoped, tag = 'scoped memory for tpu_custom_call.1']
    #allocation8 [shape = 'u8[262144]{0}', space=vmem, size = 0x40000, scoped, tag = 'input window, operand 2, single buffered']
    #allocation9 [shape = 's32[1]{0}', space=sflag, size = 0x4, scoped, tag = 'scoped memory for tpu_custom_call.1']
    #allocation10 [shape = 'u8[8192]{0}', space=vmem, size = 0x2000, scoped, tag = 'output window, operand 0, single buffered']
    %9 = vsyncpa [#allocation6], 0
    %10 = vsyncpa [#allocation9], 0
    %11 = vsyncpa [#allocation7], 0
    // Predicated region
    $region2: #{tpu_custom_call.1} parent=1 // pred_check
      _
    $region3: #{tpu_custom_call.1} parent=1 // pred_check_branch
      %13 = sbr.rel (0) target = $region5
    $region4: #{tpu_custom_call.1} parent=1 // pred_region
      %s14 = sld [smem:[#allocation4]]
      %s15 = sadd.s32 %s14, 0
      %s16 = smul.u32 2, %s15
      %s18 = ssub.s32 256, 256
      %19 = vsyncadd [#allocation6], %s18
      %s20 = smul.addr %s16, 128
      %s21 = scalar_lea.hbm %s1, %s20
      %s23 = sshll.u32 [#allocation5], 4
      %s24 = int_to_ptr.vmem [resolvable:$true] %s23
      %26 = dma.hbm_to_vmem [thread:$0]  %s21, 256, %s24, [#allocation6]
    $region5: #{tpu_custom_call.1} parent=1 // pred_fallthru
      _
    // Predicated region
    $region6: #{tpu_custom_call.1} parent=1 // pred_check
      _
    $region7: #{tpu_custom_call.1} parent=1 // pred_check_branch
      %28 = sbr.rel (0) target = $region9
    $region8: #{tpu_custom_call.1} parent=1 // pred_region
      %s29 = sld [smem:[#allocation4]]
      %s30 = sadd.s32 %s29, 0
      %s31 = smul.u32 32, %s30
      %s33 = ssub.s32 8192, 8192
      %34 = vsyncadd [#allocation9], %s33
      %s35 = smul.addr %s31, 2
      %s36 = smul.addr %s35, 128
      %s37 = scalar_lea.hbm %s2, %s36
      %s38 = sshll.u32 [#allocation8], 4
      %s39 = int_to_ptr.vmem [resolvable:$true] %s38
      %44 = dma.hbm_to_vmem [thread:$0]  %s37, 8192, %s39, [#allocation9], 256, 256, 16
    $region9: #{tpu_custom_call.1} parent=1 // pred_fallthru
      _
    // Predicated region
    $region10: #{tpu_custom_call.1} parent=1 // pred_check
      _
    $region11: #{tpu_custom_call.1} parent=1 // pred_check_branch
      %46 = sbr.rel (0) target = $region13
    $region12: #{tpu_custom_call.1} parent=1 // pred_region
      %47 = dma.done [#allocation6], 256
    $region13: #{tpu_custom_call.1} parent=1 // pred_fallthru
      _
    // Predicated region
    $region14: #{tpu_custom_call.1} parent=1 // pred_check
      _
    $region15: #{tpu_custom_call.1} parent=1 // pred_check_branch
      %49 = sbr.rel (0) target = $region17
    $region16: #{tpu_custom_call.1} parent=1 // pred_region
      %50 = dma.done [#allocation9], 8192
    $region17: #{tpu_custom_call.1} parent=1 // pred_fallthru
      _
    %s51 = sld [smem:[#allocation4]]
    %s52 = sadd.s32 %s51, 0
    %s53 = smul.u32 2, %s52
    %s54 = sld [smem:[#allocation4]]
    %s55 = sadd.s32 %s54, 0
    %s56 = smul.u32 32, %s55
    %p57 = scmp.eq.s32.totalorder 0, 0
    // Predicated region
    $region18: #{tpu_custom_call.1} parent=1 // pred_check
      %p58 = pneg %p57
    $region19: #{tpu_custom_call.1} parent=1 // pred_check_branch
      %60 = sbr.rel (%p58) target = $region21
    $region20: #{tpu_custom_call.1} parent=1 // pred_region
      %61 = vst [vmem:[#allocation2] sm:$0xff] 0.0
      %62 = vst [vmem:[#allocation2 + $0x8] sm:$0xff] 0.0
    $region21: #{tpu_custom_call.1} parent=1 // pred_fallthru
      _
    %v63 = vld [vmem:[#allocation2] sm:$0xff]
    %v64 = vld [vmem:[#allocation2 + $0x8] sm:$0xff]
    %v65 = vld [vmem:[#allocation5] sm:$0xff]
    %v66 = vld [vmem:[#allocation5 + $0x8] sm:$0xff]
    %v67 = vld [vmem:[#allocation8] sm:$0xff]
    %v68 = vld [vmem:[#allocation8 + $0x8] sm:$0xff]
    %v69 = vld [vmem:[#allocation8 + $0x10] sm:$0xff]
    %v70 = vld [vmem:[#allocation8 + $0x18] sm:$0xff]
    %v71 = vld [vmem:[#allocation8 + $0x20] sm:$0xff]
    %v72 = vld [vmem:[#allocation8 + $0x28] sm:$0xff]
    %v73 = vld [vmem:[#allocation8 + $0x30] sm:$0xff]
    %v74 = vld [vmem:[#allocation8 + $0x38] sm:$0xff]
    %v75 = vld [vmem:[#allocation8 + $0x40] sm:$0xff]
    %v76 = vld [vmem:[#allocation8 + $0x48] sm:$0xff]
    %v77 = vld [vmem:[#allocation8 + $0x50] sm:$0xff]
    %v78 = vld [vmem:[#allocation8 + $0x58] sm:$0xff]
    %v79 = vld [vmem:[#allocation8 + $0x60] sm:$0xff]
    %v80 = vld [vmem:[#allocation8 + $0x68] sm:$0xff]
    %v81 = vld [vmem:[#allocation8 + $0x70] sm:$0xff]
    %v82 = vld [vmem:[#allocation8 + $0x78] sm:$0xff]
    %v83 = vld [vmem:[#allocation8 + $0x80] sm:$0xff]
    %v84 = vld [vmem:[#allocation8 + $0x88] sm:$0xff]
    %v85 = vld [vmem:[#allocation8 + $0x90] sm:$0xff]
    %v86 = vld [vmem:[#allocation8 + $0x98] sm:$0xff]
    %v87 = vld [vmem:[#allocation8 + $0xa0] sm:$0xff]
    %v88 = vld [vmem:[#allocation8 + $0xa8] sm:$0xff]
    %v89 = vld [vmem:[#allocation8 + $0xb0] sm:$0xff]
    %v90 = vld [vmem:[#allocation8 + $0xb8] sm:$0xff]
    %v91 = vld [vmem:[#allocation8 + $0xc0] sm:$0xff]
    %v92 = vld [vmem:[#allocation8 + $0xc8] sm:$0xff]
    %v93 = vld [vmem:[#allocation8 + $0xd0] sm:$0xff]
    %v94 = vld [vmem:[#allocation8 + $0xd8] sm:$0xff]
    %v95 = vld [vmem:[#allocation8 + $0xe0] sm:$0xff]
    %v96 = vld [vmem:[#allocation8 + $0xe8] sm:$0xff]
    %v97 = vld [vmem:[#allocation8 + $0xf0] sm:$0xff]
    %v98 = vld [vmem:[#allocation8 + $0xf8] sm:$0xff]
    %v99 = vld [vmem:[#allocation8 + $0x100] sm:$0xff]
    %v100 = vld [vmem:[#allocation8 + $0x108] sm:$0xff]
    %v101 = vld [vmem:[#allocation8 + $0x110] sm:$0xff]
    %v102 = vld [vmem:[#allocation8 + $0x118] sm:$0xff]
    %v103 = vld [vmem:[#allocation8 + $0x120] sm:$0xff]
    %v104 = vld [vmem:[#allocation8 + $0x128] sm:$0xff]
    %v105 = vld [vmem:[#allocation8 + $0x130] sm:$0xff]
    %v106 = vld [vmem:[#allocation8 + $0x138] sm:$0xff]
    %v107 = vld [vmem:[#allocation8 + $0x140] sm:$0xff]
    %v108 = vld [vmem:[#allocation8 + $0x148] sm:$0xff]
    %v109 = vld [vmem:[#allocation8 + $0x150] sm:$0xff]
    %v110 = vld [vmem:[#allocation8 + $0x158] sm:$0xff]
    %v111 = vld [vmem:[#allocation8 + $0x160] sm:$0xff]
    %v112 = vld [vmem:[#allocation8 + $0x168] sm:$0xff]
    %v113 = vld [vmem:[#allocation8 + $0x170] sm:$0xff]
    %v114 = vld [vmem:[#allocation8 + $0x178] sm:$0xff]
    %v115 = vld [vmem:[#allocation8 + $0x180] sm:$0xff]
    %v116 = vld [vmem:[#allocation8 + $0x188] sm:$0xff]
    %v117 = vld [vmem:[#allocation8 + $0x190] sm:$0xff]
    %v118 = vld [vmem:[#allocation8 + $0x198] sm:$0xff]
    %v119 = vld [vmem:[#allocation8 + $0x1a0] sm:$0xff]
    %v120 = vld [vmem:[#allocation8 + $0x1a8] sm:$0xff]
    %v121 = vld [vmem:[#allocation8 + $0x1b0] sm:$0xff]
    %v122 = vld [vmem:[#allocation8 + $0x1b8] sm:$0xff]
    %v123 = vld [vmem:[#allocation8 + $0x1c0] sm:$0xff]
    %v124 = vld [vmem:[#allocation8 + $0x1c8] sm:$0xff]
    %v125 = vld [vmem:[#allocation8 + $0x1d0] sm:$0xff]
    %v126 = vld [vmem:[#allocation8 + $0x1d8] sm:$0xff]
    %v127 = vld [vmem:[#allocation8 + $0x1e0] sm:$0xff]
    %v128 = vld [vmem:[#allocation8 + $0x1e8] sm:$0xff]
    %v129 = vld [vmem:[#allocation8 + $0x1f0] sm:$0xff]
    %v130 = vld [vmem:[#allocation8 + $0x1f8] sm:$0xff]
    %131 = vmatprep.subr.mxu0 %v68
    %132 = vmatpush1.msra.mxu0 %v67
    %133 = vmatprep.subr.mxu0 %v70
    %134 = vmatpush1.msra.mxu0 %v69
    %135 = vmatprep.subr.mxu0 %v72
    %136 = vmatpush1.msra.mxu0 %v71
    %137 = vmatprep.subr.mxu0 %v74
    %138 = vmatpush1.msra.mxu0 %v73
    %139 = vmatprep.subr.mxu0 %v76
    %140 = vmatpush1.msra.mxu0 %v75
    %141 = vmatprep.subr.mxu0 %v78
    %142 = vmatpush1.msra.mxu0 %v77
    %143 = vmatprep.subr.mxu0 %v80
    %144 = vmatpush1.msra.mxu0 %v79
    %145 = vmatprep.subr.mxu0 %v82
    %146 = vmatpush1.msra.mxu0 %v81
    %147 = vmatprep.subr.mxu0 %v84
    %148 = vmatpush1.msra.mxu0 %v83
    %149 = vmatprep.subr.mxu0 %v86
    %150 = vmatpush1.msra.mxu0 %v85
    %151 = vmatprep.subr.mxu0 %v88
    %152 = vmatpush1.msra.mxu0 %v87
    %153 = vmatprep.subr.mxu0 %v90
    %154 = vmatpush1.msra.mxu0 %v89
    %155 = vmatprep.subr.mxu0 %v92
    %156 = vmatpush1.msra.mxu0 %v91
    %157 = vmatprep.subr.mxu0 %v94
    %158 = vmatpush1.msra.mxu0 %v93
    %159 = vmatprep.subr.mxu0 %v96
    %160 = vmatpush1.msra.mxu0 %v95
    %161 = vmatprep.subr.mxu0 %v98
    %162 = vmatpush1.msra.mxu0 %v97
    %163 = vmatprep.subr.mxu0 %v100
    %164 = vmatpush1.msra.mxu0 %v99
    %165 = vmatprep.subr.mxu0 %v102
    %166 = vmatpush1.msra.mxu0 %v101
    %167 = vmatprep.subr.mxu0 %v104
    %168 = vmatpush1.msra.mxu0 %v103
    %169 = vmatprep.subr.mxu0 %v106
    %170 = vmatpush1.msra.mxu0 %v105
    %171 = vmatprep.subr.mxu0 %v108
    %172 = vmatpush1.msra.mxu0 %v107
    %173 = vmatprep.subr.mxu0 %v110
    %174 = vmatpush1.msra.mxu0 %v109
    %175 = vmatprep.subr.mxu0 %v112
    %176 = vmatpush1.msra.mxu0 %v111
    %177 = vmatprep.subr.mxu0 %v114
    %178 = vmatpush1.msra.mxu0 %v113
    %179 = vmatprep.subr.mxu0 %v116
    %180 = vmatpush1.msra.mxu0 %v115
    %181 = vmatprep.subr.mxu0 %v118
    %182 = vmatpush1.msra.mxu0 %v117
    %183 = vmatprep.subr.mxu0 %v120
    %184 = vmatpush1.msra.mxu0 %v119
    %185 = vmatprep.subr.mxu0 %v122
    %186 = vmatpush1.msra.mxu0 %v121
    %187 = vmatprep.subr.mxu0 %v124
    %188 = vmatpush1.msra.mxu0 %v123
    %189 = vmatprep.subr.mxu0 %v126
    %190 = vmatpush1.msra.mxu0 %v125
    %191 = vmatprep.subr.mxu0 %v128
    %192 = vmatpush1.msra.mxu0 %v127
    %193 = vmatprep.subr.mxu0 %v130
    %194 = vmatpush1.msra.mxu0 %v129
    %195 = vmatprep.mubr.f32.mxu0 %v66
    %196 = vmatmul.mubr.f32.gmra.mrb[0].mxu0 %v65
    %v197 = vpop.f32.mrb[0].mxu0
    %v198 = vadd.f32 0.0, %v197
    %v199 = vpop.f32.mrb[0].mxu0
    %v200 = vadd.f32 0.0, %v199
    %201 = vdwg.mxu0
    %v202 = vadd.f32 %v63, %v198
    %v203 = vadd.f32 %v64, %v200
    %204 = vst [vmem:[#allocation2] sm:$0xff] %v202
    %205 = vst [vmem:[#allocation2 + $0x8] sm:$0xff] %v203
    // Predicated region
    $region22: #{tpu_custom_call.1} parent=1 // pred_check
      %p206 = pneg %p57
    $region23: #{tpu_custom_call.1} parent=1 // pred_check_branch
      %208 = sbr.rel (%p206) target = $region25
    $region24: #{tpu_custom_call.1} parent=1 // pred_region
      %v209 = vld [vmem:[#allocation2] sm:$0xff]
      %v210 = vld [vmem:[#allocation2 + $0x8] sm:$0xff]
      %211 = vst [vmem:[#allocation10] sm:$0xff] %v209
      %212 = vst [vmem:[#allocation10 + $0x8] sm:$0xff] %v210
    $region25: #{tpu_custom_call.1} parent=1 // pred_fallthru
      _
    // Predicated region
    $region26: #{tpu_custom_call.1} parent=1 // pred_check
      _
    $region27: #{tpu_custom_call.1} parent=1 // pred_check_branch
      %214 = sbr.rel (0) target = $region29
    $region28: #{tpu_custom_call.1} parent=1 // pred_region
      %s216 = ssub.s32 256, 256
      %217 = vsyncadd [#allocation7], %s216
      %s219 = sshll.u32 [#allocation10], 4
      %s220 = int_to_ptr.vmem [resolvable:$true] %s219
      %222 = dma.vmem_to_hbm [thread:$0]  %s220, 256, %s3, [#allocation7]
    $region29: #{tpu_custom_call.1} parent=1 // pred_fallthru
      _
    // Predicated region
    $region30: #{tpu_custom_call.1} parent=1 // pred_check
      _
    $region31: #{tpu_custom_call.1} parent=1 // pred_check_branch
      %224 = sbr.rel (0) target = $region33
    $region32: #{tpu_custom_call.1} parent=1 // pred_region
      %225 = dma.done [#allocation7], 256
    $region33: #{tpu_custom_call.1} parent=1 // pred_fallthru
      _
    %226 = vsyncpa [#allocation6], 1
    %227 = vsyncpa [#allocation9], 1
    %228 = vsyncpa [#allocation7], 1

</llo_original>
